<compile_context>
chip_gen: v7x
topology: tpu7x:2x2x1
jax: 0.10.0
libtpu: 0.0.40
codegen_flags: <defaults>
</compile_context>

<pallas_src>
import jax
import jax.numpy as jnp
from jax.experimental import pallas as pl
from jax.experimental.pallas import tpu as pltpu

EPS = 1e-6
LANE = 128
SUBLANE = 8


def _round_up(n, m):
    return ((n + m - 1) // m) * m


def sublayer_connection_kernel(x_ref, gamma_ref, wt_ref, b_ref, o_ref):
    """Fused LayerNorm (unbiased std) -> Linear sublayer -> eval-mode dropout.

    Blocks:
      x_ref:     (tile_r, F)   activation rows, full feature width
      gamma_ref: (1, F)        LayerNorm a_2 (f32)
      wt_ref:    (F, tn)       bf16 W^T tile (in-features x out-feature tile)
      b_ref:     (1, tn)       f32 fused bias tile  (b + beta @ W^T)
      o_ref:     (tile_r, tn)  output tile
    """
    x = x_ref[...].astype(jnp.float32)                      # (tile_r, F)
    feat = x.shape[-1]
    gamma = gamma_ref[...]                                   # (1, F) f32

    mean = jnp.sum(x, axis=-1, keepdims=True) * (1.0 / feat)
    centered = x - mean
    # torch.std default: unbiased (divide by N-1); eps added to std, not var.
    # (feat == 1 would be degenerate in the original module as well.)
    var = jnp.sum(centered * centered, axis=-1, keepdims=True) * (
        1.0 / max(feat - 1, 1))
    inv = pl.reciprocal(jnp.sqrt(var) + EPS, approx=True)    # EUP slot, ~free
    # beta is folded into b_ref at prep time, so only the scale remains here.
    normed = centered * (gamma * inv)                        # (tile_r, F)

    # sublayer Linear: y = LN(x) @ W^T + b'.  bf16 operands, f32 accumulation.
    y = jnp.dot(normed.astype(jnp.bfloat16), wt_ref[...],
                preferred_element_type=jnp.float32)
    y = y + b_ref[...]

    # dropout: eval-mode identity.
    o_ref[...] = y.astype(o_ref.dtype)


def prepare_params(gamma, beta, w, b):
    """One-time parameter prep.  Hoist OUT of the per-forward hot path.

    - pre-transpose the Linear weight to (in, out) and cast to bf16 once, so
      no per-call F x F HBM transpose/cast pass is paid;
    - fold LayerNorm's beta through the Linear into the bias in f32:
        LN(x) @ W^T + b = (gamma * xhat) @ W^T + (b + beta @ W^T).
    """
    f = gamma.shape[0]
    gamma32 = gamma.astype(jnp.float32).reshape(1, f)
    w32 = w.astype(jnp.float32)
    b_fused = (b.astype(jnp.float32)
               + beta.astype(jnp.float32) @ w32.T).reshape(1, f)
    wt_bf16 = w32.T.astype(jnp.bfloat16)                     # (in, out)
    return gamma32, wt_bf16, b_fused


def _choose_tiles(n_rows, feat, x_itemsize, out_itemsize):
    """Pick (tile_r, tn) so double-buffered blocks stay well under 64 MiB VMEM
    (v7x ceiling; v5e/v6e have 128 MiB), while keeping blocks large."""
    # Output-feature tile: keep the double-buffered bf16 W^T block <= ~16 MiB.
    tn = feat
    if feat % LANE == 0:
        while 2 * feat * tn * 2 > (16 << 20) and (tn // 2) % LANE == 0:
            tn //= 2
    # Row tile: keep double-buffered x + out blocks <= ~24 MiB, cap at 1024.
    tile_r = 1024
    while tile_r > SUBLANE and (
            2 * tile_r * (feat * x_itemsize + tn * out_itemsize) > (24 << 20)):
        tile_r //= 2
    tile_r = max(tile_r, SUBLANE)
    # Small inputs: aim for >= 2 row tiles so v7x's two TensorCores both work.
    if n_rows <= tile_r:
        tile_r = max(SUBLANE, _round_up(pl.cdiv(n_rows, 2), SUBLANE))
    return tile_r, tn


def sublayer_connection_apply(x, prepared, *, out_dtype=None):
    """Hot-path forward.  `prepared` = prepare_params(gamma, beta, w, b).

    x: [batch, seq, size] -> [batch, seq, size].
    Pass bf16 x / out_dtype=jnp.bfloat16 to halve HBM traffic when the
    surrounding model runs in bf16 (LN math stays f32 inside the kernel).
    """
    gamma32, wt_bf16, b_fused = prepared
    B, S, F = x.shape
    if out_dtype is None:
        out_dtype = x.dtype
    R = B * S
    x2d = x.reshape(R, F)            # free reshape; no pad, no extra HBM pass

    tile_r, tn = _choose_tiles(R, F, x2d.dtype.itemsize,
                               jnp.dtype(out_dtype).itemsize)
    grid_r = pl.cdiv(R, tile_r)      # partial last row block handled by Pallas
    grid_n = F // tn

    vmem_bytes = (2 * tile_r * F * x2d.dtype.itemsize           # x dbl-buffer
                  + 2 * tile_r * tn * jnp.dtype(out_dtype).itemsize
                  + 2 * F * tn * 2                              # bf16 W^T blocks
                  + 2 * (F + tn) * 4)                           # gamma + bias
    vmem_limit = max(32 << 20, int(vmem_bytes) + (8 << 20))

    cost = pl.CostEstimate(
        flops=2 * R * F * F,
        transcendentals=2 * R * grid_n,                         # sqrt + recip / row
        bytes_accessed=(R * F * x2d.dtype.itemsize
                        + R * F * jnp.dtype(out_dtype).itemsize
                        + grid_r * F * F * 2                    # W^T per row tile
                        + 2 * F * 4),
    )

    out = pl.pallas_call(
        sublayer_connection_kernel,
        out_shape=jax.ShapeDtypeStruct((R, F), out_dtype),
        grid_spec=pltpu.PrefetchScalarGridSpec(
            num_scalar_prefetch=0,
            grid=(grid_r, grid_n),
            in_specs=[
                pl.BlockSpec((tile_r, F), lambda i, j: (i, 0)),   # x row tile
                pl.BlockSpec((1, F), lambda i, j: (0, 0)),        # gamma (resident)
                pl.BlockSpec((F, tn), lambda i, j: (0, j)),       # bf16 W^T tile
                pl.BlockSpec((1, tn), lambda i, j: (0, j)),       # fused bias tile
            ],
            out_specs=pl.BlockSpec((tile_r, tn), lambda i, j: (i, j)),
        ),
        compiler_params=pltpu.CompilerParams(
            dimension_semantics=("parallel", "arbitrary"),
            vmem_limit_bytes=vmem_limit),
        cost_estimate=cost,
    )(x2d, gamma32, wt_bf16, b_fused)

    return out.reshape(B, S, F)


def sublayer_connection(x, gamma, beta, w, b, *, out_dtype=None):
    """Convenience wrapper (prep + apply).  For repeated forward calls, do
    `prepared = prepare_params(...)` ONCE and call sublayer_connection_apply."""
    return sublayer_connection_apply(x, prepare_params(gamma, beta, w, b),
                                     out_dtype=out_dtype)


def reference(x, gamma, beta, w, b):
    """Plain-JAX (f32) reference matching the PyTorch module semantics."""
    mean = jnp.mean(x, axis=-1, keepdims=True)
    centered = x - mean
    feat = x.shape[-1]
    std = jnp.sqrt(jnp.sum(centered ** 2, axis=-1, keepdims=True) / (feat - 1))
    normed = gamma * centered / (std + EPS) + beta
    return jnp.einsum("bsf,of->bso", normed, w) + b


if __name__ == "__main__":
    key = jax.random.PRNGKey(0)
    k1, k2, k3, k4, k5 = jax.random.split(key, 5)

    batch, seq, size = 2, 8, 32

    x = jax.random.normal(k1, (batch, seq, size), dtype=jnp.float32)

    # LayerNorm params (perturbed from the ones/zeros init so the beta->bias
    # fold is actually exercised by the check).
    gamma = 1.0 + 0.1 * jax.random.normal(k4, (size,), dtype=jnp.float32)
    beta = 0.1 * jax.random.normal(k5, (size,), dtype=jnp.float32)

    # Deterministic Linear(size, size) sublayer weights.
    w = jax.random.normal(k2, (size, size), dtype=jnp.float32) * 0.05
    b = jax.random.normal(k3, (size,), dtype=jnp.float32) * 0.01

    # One-time parameter prep, hoisted out of the forward path.
    prepared = prepare_params(gamma, beta, w, b)

    out = sublayer_connection_apply(x, prepared)
    out = jax.block_until_ready(out)

    ref = reference(x, gamma, beta, w, b)
    assert out.shape == (batch, seq, size)
    # bf16 MXU operands + approx EUP reciprocal -> loosened tolerance vs f32 ref.
    assert jnp.allclose(out, ref, atol=2e-2, rtol=2e-2), (
        float(jnp.max(jnp.abs(out - ref))))

    print("KERNEL_OK")
</pallas_src>

<mosaic_0001>
module attributes {stable_mosaic.version = 11 : i64} {
  func.func @sublayer_connection_kernel(%arg0: i32, %arg1: i32, %arg2: memref<8x32xf32, #tpu.memory_space<vmem>>, %arg3: memref<1x32xf32, #tpu.memory_space<vmem>>, %arg4: memref<32x32xbf16, #tpu.memory_space<vmem>>, %arg5: memref<1x32xf32, #tpu.memory_space<vmem>>, %arg6: memref<8x32xf32, #tpu.memory_space<vmem>>) attributes {dimension_semantics = [#tpu.dimension_semantics<parallel>, #tpu.dimension_semantics<arbitrary>], iteration_bounds = array<i64: 2, 1>, scalar_prefetch = 0 : i64, scratch_operands = 0 : i64, tpu.core_type = #tpu.core_type<tc>, window_params = [{transform_indices = @transform_0, window_bounds = array<i64: 8, 32>}, {pipeline_mode = #tpu.pipeline_mode<synchronous>, transform_indices = @transform_1, window_bounds = array<i64: 1, 32>}, {transform_indices = @transform_2, window_bounds = array<i64: 32, 32>}, {transform_indices = @transform_3, window_bounds = array<i64: 1, 32>}, {transform_indices = @transform_4, window_bounds = array<i64: 8, 32>}]} {
    %c0 = arith.constant 0 : index
    %c0_0 = arith.constant 0 : index
    %0 = vector.load %arg2[%c0, %c0_0] : memref<8x32xf32, #tpu.memory_space<vmem>>, vector<8x32xf32>
    %c0_1 = arith.constant 0 : index
    %c0_2 = arith.constant 0 : index
    %1 = vector.load %arg3[%c0_1, %c0_2] : memref<1x32xf32, #tpu.memory_space<vmem>>, vector<1x32xf32>
    %cst = arith.constant dense<0.000000e+00> : vector<8xf32>
    %2 = vector.multi_reduction <add>, %0, %cst [1] : vector<8x32xf32> to vector<8xf32>
    %3 = vector.shape_cast %2 : vector<8xf32> to vector<8x1xf32>
    %cst_3 = arith.constant 3.125000e-02 : f32
    %4 = vector.broadcast %cst_3 : f32 to vector<8x1xf32>
    %5 = arith.mulf %3, %4 : vector<8x1xf32>
    %6 = vector.broadcast %5 : vector<8x1xf32> to vector<8x32xf32>
    %7 = arith.subf %0, %6 : vector<8x32xf32>
    %8 = arith.mulf %7, %7 : vector<8x32xf32>
    %cst_4 = arith.constant dense<0.000000e+00> : vector<8xf32>
    %9 = vector.multi_reduction <add>, %8, %cst_4 [1] : vector<8x32xf32> to vector<8xf32>
    %10 = vector.shape_cast %9 : vector<8xf32> to vector<8x1xf32>
    %cst_5 = arith.constant 0.0322580636 : f32
    %11 = vector.broadcast %cst_5 : f32 to vector<8x1xf32>
    %12 = arith.mulf %10, %11 : vector<8x1xf32>
    %13 = math.sqrt %12 : vector<8x1xf32>
    %cst_6 = arith.constant 9.99999997E-7 : f32
    %14 = vector.broadcast %cst_6 : f32 to vector<8x1xf32>
    %15 = arith.addf %13, %14 : vector<8x1xf32>
    %16 = tpu.reciprocal %15 {approx = true} : vector<8x1xf32> -> vector<8x1xf32>
    %17 = vector.broadcast %1 : vector<1x32xf32> to vector<8x32xf32>
    %18 = vector.broadcast %16 : vector<8x1xf32> to vector<8x32xf32>
    %19 = arith.mulf %17, %18 : vector<8x32xf32>
    %20 = arith.mulf %7, %19 : vector<8x32xf32>
    %21 = arith.truncf %20 : vector<8x32xf32> to vector<8x32xbf16>
    %c0_7 = arith.constant 0 : index
    %c0_8 = arith.constant 0 : index
    %22 = vector.load %arg4[%c0_7, %c0_8] : memref<32x32xbf16, #tpu.memory_space<vmem>>, vector<32x32xbf16>
    %cst_9 = arith.constant dense<0.000000e+00> : vector<8x32xf32>
    %23 = tpu.matmul %21, %22, %cst_9 {dimension_numbers = #tpu.dot_dimension_numbers<[1], [0], [0], [1], [0, 0, 1, 1], [], []>} : vector<8x32xbf16>, vector<32x32xbf16>, vector<8x32xf32> -> vector<8x32xf32>
    %c0_10 = arith.constant 0 : index
    %c0_11 = arith.constant 0 : index
    %24 = vector.load %arg5[%c0_10, %c0_11] : memref<1x32xf32, #tpu.memory_space<vmem>>, vector<1x32xf32>
    %25 = vector.broadcast %24 : vector<1x32xf32> to vector<8x32xf32>
    %26 = arith.addf %23, %25 : vector<8x32xf32>
    %c0_12 = arith.constant 0 : index
    %c0_13 = arith.constant 0 : index
    %27 = vector.load %arg6[%c0_12, %c0_13] : memref<8x32xf32, #tpu.memory_space<vmem>>, vector<8x32xf32>
    tpu.vector_store %arg6[%c0_12, %c0_13], %26 {strides = array<i32>} : memref<8x32xf32, #tpu.memory_space<vmem>>, vector<8x32xf32>,
    return
  }
  func.func @transform_0(%arg0: i32, %arg1: i32) -> (i32, i32) {
    %c0_i32 = arith.constant 0 : i32
    %c0_i32_0 = arith.constant 0 : i32
    return %arg0, %c0_i32 : i32, i32
  }
  func.func @transform_1(%arg0: i32, %arg1: i32) -> (i32, i32) {
    %c0_i32 = arith.constant 0 : i32
    %c0_i32_0 = arith.constant 0 : i32
    %c0_i32_1 = arith.constant 0 : i32
    return %c0_i32, %c0_i32_0 : i32, i32
  }
  func.func @transform_2(%arg0: i32, %arg1: i32) -> (i32, i32) {
    %c0_i32 = arith.constant 0 : i32
    %c0_i32_0 = arith.constant 0 : i32
    return %c0_i32, %arg1 : i32, i32
  }
  func.func @transform_3(%arg0: i32, %arg1: i32) -> (i32, i32) {
    %c0_i32 = arith.constant 0 : i32
    %c0_i32_0 = arith.constant 0 : i32
    return %c0_i32, %arg1 : i32, i32
  }
  func.func @transform_4(%arg0: i32, %arg1: i32) -> (i32, i32) {
    %c0_i32 = arith.constant 0 : i32
    return %arg0, %arg1 : i32, i32
  }
}

</mosaic_0001>

<llo_original>
// kernel: tpu_custom_call.1
$region0: #{tpu_custom_call.1}
  #allocation0 [shape = 'u32[]', space=smem, size = 0x4, offset = 0x4, fixed_abs, tag = 'smem constant byte address 0x4 - core index']
  #allocation1 [shape = 'u32[144,128]{1,0:T(1,128)}', space=vmem, size = 0x12000, scoped, tag = 'internal scratch']
  %s0 = inlined_call_operand.hbm [shape: f32[16,32], index: 0, kind: input, shape index: {}]
  %s1 = inlined_call_operand.vmem [shape: f32[1,32], index: 1, kind: input, shape index: {}]
  %s2 = inlined_call_operand.hbm [shape: bf16[32,32], index: 2, kind: input, shape index: {}]
  %s3 = inlined_call_operand.vmem [shape: f32[1,32], index: 3, kind: input, shape index: {}]
  %s4 = inlined_call_operand.hbm [shape: f32[16,32], index: 4, kind: output, shape index: {}]
  %s5 = sld [smem:[#allocation0]]
  $region57: #{tpu_custom_call.1} parent=0
    _
  %s7 = ssub.s32 1, %s5
  %s8 = scalar_select 0, %s7, %s5
  $region1: #{tpu_custom_call.1} parent=0
    #allocation2 [shape = 'u8[8192]{0}', space=vmem, size = 0x2000, scoped, tag = 'input window, operand 0']
    #allocation3 [shape = 's32[2]{0}', space=sflag, size = 0x8, scoped, tag = 'scoped memory for tpu_custom_call.1']
    #allocation4 [shape = 's32[2]{0}', space=sflag, size = 0x8, scoped, tag = 'scoped memory for tpu_custom_call.1']
    #allocation5 [shape = 'u8[8192]{0}', space=vmem, size = 0x2000, scoped, tag = 'input window, operand 2, single buffered']
    #allocation6 [shape = 's32[1]{0}', space=sflag, size = 0x4, scoped, tag = 'scoped memory for tpu_custom_call.1']
    #allocation7 [shape = 'u8[8192]{0}', space=vmem, size = 0x2000, scoped, tag = 'output window, operand 0']
    %9 = vsyncpa [#allocation3], 0
    %s10 = scalar_lea.sflag [#allocation3], 1
    %11 = vsyncpa %s10, 0
    %12 = vsyncpa [#allocation6], 0
    %13 = vsyncpa [#allocation4], 0
    %s14 = scalar_lea.sflag [#allocation4], 1
    %15 = vsyncpa %s14, 0
    loop: start=0, step=1, limit=4
    $region2: #{tpu_custom_call.1} parent=1 // loop_pre_header
      _
    $region3: #{tpu_custom_call.1} parent=1 // loop_header
      %s17 = sphi 0, %s21
      %p18 = scmp.ge.s32.totalorder %s17, 4
      %s24 = sphi 0, %s36
      %s25 = sphi 0, %s32
      %s26 = sphi 0, %s24
      %s27 = sphi 0, %s25
      %s28 = sphi 0, %s26
      %s29 = sphi 0, %s27
      %s39 = sphi 0, %s41
      %s42 = sphi 0, %s39
      %s43 = sphi 0, %s42
      %s59 = sphi 0, %s43
      %s63 = sphi 0, %s63
      %s65 = sphi 0, %s63
      %s66 = sphi 0, %s65
      %s80 = sphi 0, %s66
      %s86 = sphi 0, %s88
      %s89 = sphi 0, %s86
      %s90 = sphi 0, %s89
      %s106 = sphi 0, %s90
      %s112 = sphi 0, %s114
      %s115 = sphi 0, %s112
      %s116 = sphi 0, %s115
      %s132 = sphi 0, %s116
      %s140 = sphi 0, %s142
      %s143 = sphi 0, %s140
      %s144 = sphi 0, %s143
      %s160 = sphi 0, %s144
    $region4: #{tpu_custom_call.1} parent=1 // loop_header_branch
      %20 = sbr.rel (%p18) target = $region8
    $region5: #{tpu_custom_call.1} parent=1 // loop_body
      %s22 = ssub.s32 %s17, 1
      %s23 = ssub.s32 %s17, 2
      %s30 = sadd.s32 1, %s25
      %p31 = scmp.ge.s32.totalorder %s30, 1
      %s32 = scalar_select %p31, 0, %s30
      %s33 = sadd.s32 1, %s24
      %s34 = scalar_select %p31, %s33, %s24
      %p35 = scmp.ge.s32.totalorder %s34, 2
      %s36 = scalar_select %p35, 0, %s34
      %s37 = ssub.s32 %s24, %s36
      %p38 = scmp.eq.s32.totalorder %s37, 0
      %s40 = sadd.s32 %s39, 1
      %s41 = scalar_select %p38, %s39, %s40
      %p44 = pneg %p38
      %p45 = scmp.eq.s32.totalorder %s17, 1
      %p46 = por %p44, %p45
      %p47 = scmp.ne.s32.totalorder %s39, %s42
      %p48 = scmp.eq.s32.totalorder %s17, 0
      %p49 = por %p47, %p48
      %p50 = scmp.ne.s32.totalorder %s39, %s42
      %p51 = scmp.eq.s32.totalorder %s22, 1
      %p52 = por %p50, %p51
      %p53 = scmp.ne.s32.totalorder %s42, %s43
      %p54 = scmp.eq.s32.totalorder %s22, 0
      %p55 = por %p53, %p54
      %p56 = scmp.ne.s32.totalorder %s42, %s43
      %p57 = scmp.eq.s32.totalorder %s23, 1
      %p58 = por %p56, %p57
      %p60 = scmp.ne.s32.totalorder %s43, %s59
      %p61 = scmp.eq.s32.totalorder %s23, 0
      %p62 = por %p60, %p61
      %s64 = sadd.s32 %s63, 1
      %p67 = scmp.eq.s32.totalorder %s17, 1
      %p68 = scmp.ne.s32.totalorder %s63, %s65
      %p69 = scmp.eq.s32.totalorder %s17, 0
      %p70 = por %p68, %p69
      %p71 = scmp.ne.s32.totalorder %s63, %s65
      %p72 = scmp.eq.s32.totalorder %s22, 1
      %p73 = por %p71, %p72
      %p74 = scmp.ne.s32.totalorder %s65, %s66
      %p75 = scmp.eq.s32.totalorder %s22, 0
      %p76 = por %p74, %p75
      %p77 = scmp.ne.s32.totalorder %s65, %s66
      %p78 = scmp.eq.s32.totalorder %s23, 1
      %p79 = por %p77, %p78
      %p81 = scmp.ne.s32.totalorder %s66, %s80
      %p82 = scmp.eq.s32.totalorder %s23, 0
      %p83 = por %p81, %p82
      %s84 = ssub.s32 %s25, %s32
      %p85 = scmp.eq.s32.totalorder %s84, 0
      %s87 = sadd.s32 %s86, 1
      %s88 = scalar_select %p85, %s86, %s87
      %p91 = pneg %p85
      %p92 = scmp.eq.s32.totalorder %s17, 1
      %p93 = por %p91, %p92
      %p94 = scmp.ne.s32.totalorder %s86, %s89
      %p95 = scmp.eq.s32.totalorder %s17, 0
      %p96 = por %p94, %p95
      %p97 = scmp.ne.s32.totalorder %s86, %s89
      %p98 = scmp.eq.s32.totalorder %s22, 1
      %p99 = por %p97, %p98
      %p100 = scmp.ne.s32.totalorder %s89, %s90
      %p101 = scmp.eq.s32.totalorder %s22, 0
      %p102 = por %p100, %p101
      %p103 = scmp.ne.s32.totalorder %s89, %s90
      %p104 = scmp.eq.s32.totalorder %s23, 1
      %p105 = por %p103, %p104
      %p107 = scmp.ne.s32.totalorder %s90, %s106
      %p108 = scmp.eq.s32.totalorder %s23, 0
      %p109 = por %p107, %p108
      %s110 = ssub.s32 %s25, %s32
      %p111 = scmp.eq.s32.totalorder %s110, 0
      %s113 = sadd.s32 %s112, 1
      %s114 = scalar_select %p111, %s112, %s113
      %p117 = pneg %p111
      %p118 = scmp.eq.s32.totalorder %s17, 1
      %p119 = por %p117, %p118
      %p120 = scmp.ne.s32.totalorder %s112, %s115
      %p121 = scmp.eq.s32.totalorder %s17, 0
      %p122 = por %p120, %p121
      %p123 = scmp.ne.s32.totalorder %s112, %s115
      %p124 = scmp.eq.s32.totalorder %s22, 1
      %p125 = por %p123, %p124
      %p126 = scmp.ne.s32.totalorder %s115, %s116
      %p127 = scmp.eq.s32.totalorder %s22, 0
      %p128 = por %p126, %p127
      %p129 = scmp.ne.s32.totalorder %s115, %s116
      %p130 = scmp.eq.s32.totalorder %s23, 1
      %p131 = por %p129, %p130
      %p133 = scmp.ne.s32.totalorder %s116, %s132
      %p134 = scmp.eq.s32.totalorder %s23, 0
      %p135 = por %p133, %p134
      %s136 = ssub.s32 %s24, %s36
      %s137 = ssub.s32 %s25, %s32
      %s138 = sor.u32 %s136, %s137
      %p139 = scmp.eq.s32.totalorder %s138, 0
      %s141 = sadd.s32 %s140, 1
      %s142 = scalar_select %p139, %s140, %s141
      %p145 = pneg %p139
      %p146 = scmp.eq.s32.totalorder %s17, 1
      %p147 = por %p145, %p146
      %p148 = scmp.ne.s32.totalorder %s140, %s143
      %p149 = scmp.eq.s32.totalorder %s17, 0
      %p150 = por %p148, %p149
      %p151 = scmp.ne.s32.totalorder %s140, %s143
      %p152 = scmp.eq.s32.totalorder %s22, 1
      %p153 = por %p151, %p152
      %p154 = scmp.ne.s32.totalorder %s143, %s144
      %p155 = scmp.eq.s32.totalorder %s22, 0
      %p156 = por %p154, %p155
      %p157 = scmp.ne.s32.totalorder %s143, %s144
      %p158 = scmp.eq.s32.totalorder %s23, 1
      %p159 = por %p157, %p158
      %p161 = scmp.ne.s32.totalorder %s144, %s160
      %p162 = scmp.eq.s32.totalorder %s23, 0
      %p163 = por %p161, %p162
      %p164 = scmp.le.s32.totalorder 1, %s17
      %p165 = scmp.lt.s32.totalorder %s17, 3
      %p166 = pnand %p164, %p165
      %p167 = pneg %p166
      // Predicated region
      $region9: #{tpu_custom_call.1} parent=5 // pred_check
        _
      $region10: #{tpu_custom_call.1} parent=5 // pred_check_branch
        %169 = sbr.rel (%p166) target = $region12
      $region11: #{tpu_custom_call.1} parent=5 // pred_region
        %s170 = ssub.s32 %s17, 1
        // Predicated region
        $region13: #{tpu_custom_call.1} parent=11 // pred_check
          %p171 = pneg %p76
        $region14: #{tpu_custom_call.1} parent=11 // pred_check_branch
          %173 = sbr.rel (%p171) target = $region16
        $region15: #{tpu_custom_call.1} parent=11 // pred_region
          _
        $region16: #{tpu_custom_call.1} parent=11 // pred_fallthru
          _
        // Predicated region
        $region17: #{tpu_custom_call.1} parent=11 // pred_check
          %p174 = pneg %p102
        $region18: #{tpu_custom_call.1} parent=11 // pred_check_branch
          %176 = sbr.rel (%p174) target = $region20
        $region19: #{tpu_custom_call.1} parent=11 // pred_region
          %s178 = ssub.s32 256, 256
          %179 = vsyncadd [#allocation6], %s178
          %s180 = smul.addr %s27, 64
          %s181 = scalar_lea.hbm %s2, %s180
          %s182 = sshll.u32 [#allocation5], 4
          %s183 = int_to_ptr.vmem [resolvable:$true] %s182
          %188 = dma.hbm_to_vmem [thread:$0]  %s181, 256, %s183, [#allocation6], 64, 64, 4
        $region20: #{tpu_custom_call.1} parent=11 // pred_fallthru
          _
        // Predicated region
        $region21: #{tpu_custom_call.1} parent=11 // pred_check
          %p189 = pneg %p128
        $region22: #{tpu_custom_call.1} parent=11 // pred_check_branch
          %191 = sbr.rel (%p189) target = $region24
        $region23: #{tpu_custom_call.1} parent=11 // pred_region
          %p192 = scmp.lt.s32.totalorder %s27, 0
          %s193 = scalar_select %p192, %s27, 0
          %s194 = scalar_lea.vmem %s3, %s193
        $region24: #{tpu_custom_call.1} parent=11 // pred_fallthru
          _
      $region12: #{tpu_custom_call.1} parent=5 // pred_fallthru
        _
      %p195 = scmp.lt.s32.totalorder %s17, 2
      // Predicated region
      $region25: #{tpu_custom_call.1} parent=5 // pred_check
        %p196 = pneg %p195
      $region26: #{tpu_custom_call.1} parent=5 // pred_check_branch
        %198 = sbr.rel (%p196) target = $region28
      $region27: #{tpu_custom_call.1} parent=5 // pred_region
        // Predicated region
        $region29: #{tpu_custom_call.1} parent=27 // pred_check
          %p199 = pneg %p49
        $region30: #{tpu_custom_call.1} parent=27 // pred_check_branch
          %201 = sbr.rel (%p199) target = $region32
        $region31: #{tpu_custom_call.1} parent=27 // pred_region
          %s202 = sand.u32 %s39, 1
          %s203 = scalar_lea.sflag [#allocation3], %s202
          %s204 = sand.u32 %s39, 1
          %s205 = smul.addr %s204, 8
          %s206 = scalar_lea.vmem [#allocation2], %s205
          %s208 = ssub.s32 128, 128
          %209 = vsyncadd %s203, %s208
          %s210 = smul.addr %s24, 128
          %s211 = scalar_lea.hbm %s0, %s210
          %s213 = sshll.u32 %s206, 4
          %s214 = int_to_ptr.vmem [resolvable:$true] %s213
          %216 = dma.hbm_to_vmem [thread:$0]  %s211, 128, %s214, %s203
        $region32: #{tpu_custom_call.1} parent=27 // pred_fallthru
          _
      $region28: #{tpu_custom_call.1} parent=5 // pred_fallthru
        _
      %p217 = scmp.le.s32.totalorder 1, %s17
      %p218 = scmp.lt.s32.totalorder %s17, 3
      %p219 = pnand %p217, %p218
      %p220 = pneg %p219
      // Predicated region
      $region33: #{tpu_custom_call.1} parent=5 // pred_check
        _
      $region34: #{tpu_custom_call.1} parent=5 // pred_check_branch
        %222 = sbr.rel (%p219) target = $region36
      $region35: #{tpu_custom_call.1} parent=5 // pred_region
        %s223 = ssub.s32 %s17, 1
        %s224 = sand.u32 %s42, 1
        %s225 = scalar_lea.sflag [#allocation3], %s224
        %s226 = sand.u32 %s42, 1
        %s227 = smul.addr %s226, 8
        %s228 = scalar_lea.vmem [#allocation2], %s227
        // Predicated region
        $region37: #{tpu_custom_call.1} parent=35 // pred_check
          %p229 = pneg %p55
        $region38: #{tpu_custom_call.1} parent=35 // pred_check_branch
          %231 = sbr.rel (%p229) target = $region40
        $region39: #{tpu_custom_call.1} parent=35 // pred_region
          %232 = dma.done %s225, 128
        $region40: #{tpu_custom_call.1} parent=35 // pred_fallthru
          _
        // Predicated region
        $region41: #{tpu_custom_call.1} parent=35 // pred_check
          %p233 = pneg %p102
        $region42: #{tpu_custom_call.1} parent=35 // pred_check_branch
          %235 = sbr.rel (%p233) target = $region44
        $region43: #{tpu_custom_call.1} parent=35 // pred_region
          %236 = dma.done [#allocation6], 256
        $region44: #{tpu_custom_call.1} parent=35 // pred_fallthru
          _
        %s237 = sand.u32 %s42, 1
        %s238 = scalar_lea.sflag [#allocation3], %s237
        %s239 = sand.u32 %s42, 1
        %s240 = smul.addr %s239, 8
        %s241 = scalar_lea.vmem [#allocation2], %s240
        %p242 = pneg %p55
        %p243 = pneg %p52
        %p244 = pneg %p76
        %p245 = pneg %p73
        %p246 = pneg %p102
        %p247 = pneg %p99
        %p248 = scmp.lt.s32.totalorder %s27, 0
        %s249 = scalar_select %p248, %s27, 0
        %s250 = scalar_lea.vmem %s3, %s249
        %p251 = pneg %p128
        %p252 = pneg %p125
        %p253 = pneg %p156
        %p254 = pneg %p153
        %s255 = sand.u32 %s143, 1
        %s256 = scalar_lea.sflag [#allocation4], %s255
        %s257 = sand.u32 %s143, 1
        %s258 = smul.addr %s257, 8
        %s259 = scalar_lea.vmem [#allocation7], %s258
        %p260 = scmp.lt.s32.totalorder %s27, 0
        %s261 = scalar_select %p260, %s27, 0
        %s262 = scalar_lea.vmem %s3, %s261
        %v264 = vld [vmem:[%s228] sm:$0xff]
        %v265 = vld [vmem:[%s1] sm:$0x1]
        %vm266 = vcmask 261120
        %v267 = vsel %vm266, %v264, 0.0
        %268 = vadd.xlane.f32.xlu0 %v267
        %v269 = vpop.xlane.xlu0 %268
        %v270 = vmul.f32 %v269, 0.03125
        %v271 = vsub.f32 %v264, %v270
        %v272 = vmul.f32 %v271, %v271
        %v273 = vsel %vm266, %v272, 0.0
        %274 = vadd.xlane.f32.xlu0 %v273
        %v275 = vpop.xlane.xlu0 %274
        %v276 = vmul.f32 %v275, 0.032258064
        %v277 = vrsqrt.pop %v276
        %v278 = vmul.f32 %v276, %v277
        %vm279 = vcmp.eq.f32.partialorder %v276, inf
        %v280 = vsel %vm279, %v276, %v278
        %vm281 = vcmp.eq.f32.partialorder %v276, 0.0
        %v282 = vand.u32 %v276, 2147483648
        %v283 = vsel %vm281, %v282, %v280
        %v284 = vadd.f32 %v283, 1e-06
        %v285 = vrcp.pop %v284
        %v287 = vlaneseq
        %v288 = vshrl.u32 %v287, 7
        %v289 = vsub.s32 0, %v288
        %v290 = vrot.slane %v265, %v289
        %v292 = vmul.f32 %v290, %v285
        %v293 = vmul.f32 %v271, %v292
        %v294 = vpack.c.bf16 %v293, %v293
        %v295 = vld [vmem:[#allocation5] sm:$0xf]
        %v296 = vld [vmem:[#allocation5 + $0x4] sm:$0xf]
        %v297 = vld [vmem:[#allocation5 + $0x8] sm:$0xf]
        %v298 = vld [vmem:[#allocation5 + $0xc] sm:$0xf]
        %v299 = vld [vmem:[%s262] sm:$0x1]
        %v301 = vlaneseq
        %v302 = vshrl.u32 %v301, 7
        %v303 = vsub.s32 0, %v302
        %v304 = vrot.slane %v299, %v303
        %v310 = vunpack.c.l.b16 %v295
        %v311 = vunpack.c.l.b16 %v296
        %v312 = vunpack.c.l.b16 %v297
        %v313 = vunpack.c.l.b16 %v298
        %v314 = vpack.c.b16 %v311, %v310
        %v315 = vpack.c.b16 %v313, %v312
        %v319 = vsel %vm266, %v294, 0
        %321 = vmatprep.subr.bf16.mxu0 0
        %322 = vmatpush1.bf16.msra.mxu0 %v314
        %323 = vmatprep.subr.bf16.mxu0 0
        %324 = vmatpush1.bf16.msra.mxu0 %v315
        %325 = vmatprep.subr.bf16.mxu0 0
        %326 = vmatpush1.bf16.msra.mxu0 0
        %327 = vmatprep.subr.bf16.mxu0 0
        %328 = vmatpush1.bf16.msra.mxu0 0
        %329 = vmatprep.subr.bf16.mxu0 0
        %330 = vmatpush1.bf16.msra.mxu0 0
        %331 = vmatprep.subr.bf16.mxu0 0
        %332 = vmatpush1.bf16.msra.mxu0 0
        %333 = vmatprep.subr.bf16.mxu0 0
        %334 = vmatpush1.bf16.msra.mxu0 0
        %335 = vmatprep.subr.bf16.mxu0 0
        %336 = vmatpush1.bf16.msra.mxu0 0
        %337 = vmatprep.subr.bf16.mxu0 0
        %338 = vmatpush1.bf16.msra.mxu0 0
        %339 = vmatprep.subr.bf16.mxu0 0
        %340 = vmatpush1.bf16.msra.mxu0 0
        %341 = vmatprep.subr.bf16.mxu0 0
        %342 = vmatpush1.bf16.msra.mxu0 0
        %343 = vmatprep.subr.bf16.mxu0 0
        %344 = vmatpush1.bf16.msra.mxu0 0
        %345 = vmatprep.subr.bf16.mxu0 0
        %346 = vmatpush1.bf16.msra.mxu0 0
        %347 = vmatprep.subr.bf16.mxu0 0
        %348 = vmatpush1.bf16.msra.mxu0 0
        %349 = vmatprep.subr.bf16.mxu0 0
        %350 = vmatpush1.bf16.msra.mxu0 0
        %351 = vmatprep.subr.bf16.mxu0 0
        %352 = vmatpush1.bf16.msra.mxu0 0
        %353 = vmatprep.mubr.bf16.mxu0 0
        %354 = vmatmul.mubr.bf16.gmra.mrb[0].mxu0 %v319
        %v355 = vpop.f32.mrb[0].mxu0
        %v356 = vadd.f32 %v304, %v355
        %v357 = vpop.f32.mrb[0].mxu0
        %v358 = vpop.f32.mrb[0].mxu0
        %v359 = vpop.f32.mrb[0].mxu0
        %360 = vdwg.mxu0
        %361 = vst.msk [vmem:[%s259] sm:$0xff] %vm266, %v356
        %s362 = sand.u32 %s143, 1
        %s363 = scalar_lea.sflag [#allocation4], %s362
        %s364 = sand.u32 %s143, 1
        %s365 = smul.addr %s364, 8
        %s366 = scalar_lea.vmem [#allocation7], %s365
        // Predicated region
        $region45: #{tpu_custom_call.1} parent=35 // pred_check
          %p367 = pneg %p153
        $region46: #{tpu_custom_call.1} parent=35 // pred_check_branch
          %369 = sbr.rel (%p367) target = $region48
        $region47: #{tpu_custom_call.1} parent=35 // pred_region
          %s371 = ssub.s32 128, 128
          %372 = vsyncadd %s363, %s371
          %s373 = sadd.s32 %s27, %s26
          %s374 = smul.addr %s373, 128
          %s375 = scalar_lea.hbm %s4, %s374
          %s377 = sshll.u32 %s366, 4
          %s378 = int_to_ptr.vmem [resolvable:$true] %s377
          %380 = dma.vmem_to_hbm [thread:$0]  %s378, 128, %s375, %s363
        $region48: #{tpu_custom_call.1} parent=35 // pred_fallthru
          _
      $region36: #{tpu_custom_call.1} parent=5 // pred_fallthru
        _
      %p381 = scmp.le.s32.totalorder 2, %s17
      // Predicated region
      $region49: #{tpu_custom_call.1} parent=5 // pred_check
        %p382 = pneg %p381
      $region50: #{tpu_custom_call.1} parent=5 // pred_check_branch
        %384 = sbr.rel (%p382) target = $region52
      $region51: #{tpu_custom_call.1} parent=5 // pred_region
        %s385 = ssub.s32 %s17, 2
        // Predicated region
        $region53: #{tpu_custom_call.1} parent=51 // pred_check
          %p386 = pneg %p159
        $region54: #{tpu_custom_call.1} parent=51 // pred_check_branch
          %388 = sbr.rel (%p386) target = $region56
        $region55: #{tpu_custom_call.1} parent=51 // pred_region
          %s389 = sand.u32 %s144, 1
          %s390 = scalar_lea.sflag [#allocation4], %s389
          %s391 = sand.u32 %s144, 1
          %s392 = smul.addr %s391, 8
          %s393 = scalar_lea.vmem [#allocation7], %s392
          %394 = dma.done %s390, 128
        $region56: #{tpu_custom_call.1} parent=51 // pred_fallthru
          _
      $region52: #{tpu_custom_call.1} parent=5 // pred_fallthru
        _
    $region6: #{tpu_custom_call.1} parent=1 // loop_footer
      %s21 = sadd.s32 1, %s17
    $region7: #{tpu_custom_call.1} parent=1 // loop_footer_branch
      %16 = sbr.rel target = $region3
    $region8: #{tpu_custom_call.1} parent=1 // loop_exit
      _
    %395 = vsyncpa [#allocation3], 1
    %s396 = scalar_lea.sflag [#allocation3], 1
    %397 = vsyncpa %s396, 1
    %398 = vsyncpa [#allocation6], 1
    %399 = vsyncpa [#allocation4], 1
    %s400 = scalar_lea.sflag [#allocation4], 1
    %401 = vsyncpa %s400, 1

</llo_original>
